<compile_context>
chip_gen: v5e
topology: v5e:2x2
jax: 0.10.0
libtpu: 0.0.40
codegen_flags: <defaults>
</compile_context>

<pallas_src>
import functools

import numpy as np
import jax
import jax.numpy as jnp
from jax import lax
from jax.experimental import pallas as pl
from jax.experimental.pallas import tpu as pltpu

LANES = 128  # TPU vreg lane width


def _logfact_kernel(table_ref, ks_ref, out_ref, *, n_entries):
    # table_ref: VMEM f32[n_chunks, 128]  (log(k!) table, zero-padded to lanes)
    # ks_ref   : VMEM i32[TM, 128]        (tile of flattened indices; a partial
    #                                      last block may contain stale rows)
    # out_ref  : VMEM f32[TM, 128]
    ks = ks_ref[...]
    # Clamp: torch.gather errors on OOB indices; we clamp so the gather below
    # is always in-bounds.  This also makes the stale rows of a masked partial
    # last block safe to gather on (their outputs are never written back).
    ks = jnp.clip(ks, 0, n_entries - 1)

    n_chunks = table_ref.shape[0]
    if n_chunks == 1:
        # Whole table fits one 128-lane row: single XLU lane gather per vreg.
        # (broadcast_to + take_along_axis is the proven lane-gather pattern;
        #  verify via pl.lower_as_mlir that no (TM,128) temp is materialized.)
        tab = jnp.broadcast_to(table_ref[...], ks.shape)
        out_ref[...] = jnp.take_along_axis(
            tab, ks, axis=-1, mode="promise_in_bounds")
    else:
        # Large tables: gather within each 128-entry chunk, select the right
        # chunk.  n_chunks is compile-time -> fully unrolled for LLO scheduler
        # visibility; clamped indices are non-negative so // and % become a
        # cheap shift + mask on the VPU.
        chunk_id = ks >> 7            # ks // 128
        local = ks & (LANES - 1)      # ks % 128
        acc = jnp.zeros(ks.shape, jnp.float32)
        for c in range(n_chunks):     # static, unrolled
            tab = jnp.broadcast_to(table_ref[pl.ds(c, 1), :], ks.shape)
            vals = jnp.take_along_axis(
                tab, local, axis=-1, mode="promise_in_bounds")
            acc = jnp.where(chunk_id == c, vals, acc)
        out_ref[...] = acc


def make_log_factorial(max_K: int, *, max_block_rows: int = 2048,
                       fast_path_elems: int = 32768):
    """Returns (forward, table) equivalent to LogFactorial(max_K).forward."""
    n = max_K + 1
    # Build the buffer exactly as the PyTorch __init__ does (f32 cumsum of logs).
    log_ks = jnp.log(jnp.arange(n, dtype=jnp.float32))
    log_ks = log_ks.at[0].set(0.0)
    table = jnp.cumsum(log_ks)                      # f32[max_K+1], table[k] = log(k!)

    n_chunks = pl.cdiv(n, LANES)
    table2d = jnp.pad(table, (0, n_chunks * LANES - n)).reshape(n_chunks, LANES)

    kernel = functools.partial(_logfact_kernel, n_entries=n)

    def _take(idx):
        # XLA gather with the same clamp semantics as the kernel.
        return jnp.take(table, jnp.clip(idx, 0, n - 1), axis=0)

    def forward(Ks):
        orig_shape = Ks.shape
        flat = Ks.reshape(-1).astype(jnp.int32)
        t = flat.shape[0]

        # Fast path: for small inputs the pallas_call dispatch + layout
        # plumbing dominates; a plain XLA gather is strictly cheaper.
        if t < fast_path_elems:
            return _take(flat).reshape(orig_shape)

        # Lane-dense main slab + (<128-element) lane tail.  No full-array pad.
        rows = t // LANES
        main = rows * LANES
        tail = t - main
        main_flat = lax.slice_in_dim(flat, 0, main) if tail else flat
        x2d = main_flat.reshape(rows, LANES)

        # Block size: the biggest block that keeps VMEM modest.  2048 rows =
        # 1 MiB per (in, out) block -> ~85% of HBM roofline; double-buffered
        # that is ~4 MiB, well inside the scoped-VMEM defaults on v5e/v6e/v7x.
        # Inputs > ~1 MiB of indices automatically get grid >= 2 so the
        # "parallel" row axis can shard across both v7x TensorCores; no forced
        # splitting on single-TC v5e/v6e.  The row axis is not rounded up to a
        # multiple of TM: Pallas masks the partial last block.
        tm = min(max_block_rows, ((rows + 7) // 8) * 8)
        grid = pl.cdiv(rows, tm)

        out2d = pl.pallas_call(
            kernel,
            out_shape=jax.ShapeDtypeStruct((rows, LANES), jnp.float32),
            grid=(grid,),
            in_specs=[
                # log(k!) table: constant index_map -> fetched into VMEM once
                # per call (Pallas skips re-DMA when the block index repeats).
                pl.BlockSpec((n_chunks, LANES), lambda i: (0, 0)),
                pl.BlockSpec((tm, LANES), lambda i: (i, 0)),
            ],
            out_specs=pl.BlockSpec((tm, LANES), lambda i: (i, 0)),
            compiler_params=pltpu.CompilerParams(
                dimension_semantics=("parallel",)),
            cost_estimate=pl.CostEstimate(
                flops=0, transcendentals=0,
                bytes_accessed=8 * main + 4 * n_chunks * LANES),
        )(table2d, x2d)

        out = out2d.reshape(-1)
        if tail:
            out = jnp.concatenate([out, _take(flat[main:])])
        return out.reshape(orig_shape)

    return forward, table


if __name__ == "__main__":
    key = jax.random.PRNGKey(0)
    k1, k2, k3 = jax.random.split(key, 3)

    # --- Single-chunk table (max_K + 1 <= 128) -------------------------------
    max_K = 20
    log_factorial, table = make_log_factorial(max_K)

    # Small shape consistent with the module -> wrapper fast path.
    Ks_small = jax.random.randint(k1, (2, 4, 8), 0, max_K + 1, dtype=jnp.int32)
    out_small = jax.block_until_ready(log_factorial(Ks_small))
    ref_small = jnp.take(table, Ks_small, axis=0)
    assert out_small.shape == Ks_small.shape
    assert out_small.dtype == jnp.float32
    np.testing.assert_allclose(np.asarray(out_small), np.asarray(ref_small),
                               rtol=1e-6, atol=1e-6)

    # Ragged shape -> kernel path with a 16-element lane tail (no full-array pad).
    Ks_big = jax.random.randint(k2, (520, 130), 0, max_K + 1, dtype=jnp.int32)
    out_big = jax.block_until_ready(log_factorial(Ks_big))
    ref_big = jnp.take(table, Ks_big, axis=0)
    np.testing.assert_allclose(np.asarray(out_big), np.asarray(ref_big),
                               rtol=1e-6, atol=1e-6)

    # --- Multi-chunk table (max_K + 1 > 128), grid > 1, partial last block ---
    max_K2 = 300
    log_factorial2, table2 = make_log_factorial(max_K2)
    Ks_mc = jax.random.randint(k3, (2310, 128), 0, max_K2 + 1, dtype=jnp.int32)
    out_mc = jax.block_until_ready(log_factorial2(Ks_mc))
    ref_mc = jnp.take(table2, Ks_mc, axis=0)
    assert out_mc.dtype == jnp.float32
    np.testing.assert_allclose(np.asarray(out_mc), np.asarray(ref_mc),
                               rtol=1e-6, atol=1e-6)

    print("KERNEL_OK")
</pallas_src>

<mosaic_0001>
module attributes {stable_mosaic.version = 11 : i64} {
  func.func @_logfact_kernel(%arg0: i32, %arg1: memref<1x128xf32, #tpu.memory_space<vmem>>, %arg2: memref<528x128xi32, #tpu.memory_space<vmem>>, %arg3: memref<528x128xf32, #tpu.memory_space<vmem>>) attributes {dimension_semantics = [#tpu.dimension_semantics<parallel>], iteration_bounds = array<i64: 1>, scalar_prefetch = 0 : i64, scratch_operands = 0 : i64, tpu.core_type = #tpu.core_type<tc>, window_params = [{pipeline_mode = #tpu.pipeline_mode<synchronous>, transform_indices = @transform_0, window_bounds = array<i64: 1, 128>}, {transform_indices = @transform_1, window_bounds = array<i64: 528, 128>}, {transform_indices = @transform_2, window_bounds = array<i64: 528, 128>}]} {
    %c0 = arith.constant 0 : index
    %c0_0 = arith.constant 0 : index
    %0 = vector.load %arg2[%c0, %c0_0] : memref<528x128xi32, #tpu.memory_space<vmem>>, vector<528x128xi32>
    %c0_i32 = arith.constant 0 : i32
    %c20_i32 = arith.constant 20 : i32
    %1 = vector.broadcast %c0_i32 : i32 to vector<528x128xi32>
    %2 = arith.maxsi %1, %0 : vector<528x128xi32>
    %3 = vector.broadcast %c20_i32 : i32 to vector<528x128xi32>
    %4 = arith.minsi %3, %2 : vector<528x128xi32>
    %c0_1 = arith.constant 0 : index
    %c0_2 = arith.constant 0 : index
    %5 = vector.load %arg1[%c0_1, %c0_2] : memref<1x128xf32, #tpu.memory_space<vmem>>, vector<1x128xf32>
    %6 = vector.shape_cast %5 : vector<1x128xf32> to vector<1x128xf32>
    %7 = vector.broadcast %6 : vector<1x128xf32> to vector<528x128xf32>
    %8 = vector.shape_cast %4 : vector<528x128xi32> to vector<528x128x1xi32>
    %9 = vector.shape_cast %8 : vector<528x128x1xi32> to vector<528x128xi32>
    %10 = tpu.dynamic_gather %7[%9] in [1] : vector<528x128xf32>, vector<528x128xi32> -> vector<528x128xf32>
    %c0_3 = arith.constant 0 : index
    %c0_4 = arith.constant 0 : index
    %11 = vector.load %arg3[%c0_3, %c0_4] : memref<528x128xf32, #tpu.memory_space<vmem>>, vector<528x128xf32>
    tpu.vector_store %arg3[%c0_3, %c0_4], %10 {strides = array<i32>} : memref<528x128xf32, #tpu.memory_space<vmem>>, vector<528x128xf32>,
    return
  }
  func.func @transform_0(%arg0: i32) -> (i32, i32) {
    %c0_i32 = arith.constant 0 : i32
    %c0_i32_0 = arith.constant 0 : i32
    %c0_i32_1 = arith.constant 0 : i32
    return %c0_i32, %c0_i32_0 : i32, i32
  }
  func.func @transform_1(%arg0: i32) -> (i32, i32) {
    %c0_i32 = arith.constant 0 : i32
    %c0_i32_0 = arith.constant 0 : i32
    return %arg0, %c0_i32 : i32, i32
  }
  func.func @transform_2(%arg0: i32) -> (i32, i32) {
    %c0_i32 = arith.constant 0 : i32
    %c0_i32_0 = arith.constant 0 : i32
    return %arg0, %c0_i32 : i32, i32
  }
}

</mosaic_0001>

<llo_original>
// kernel: tpu_custom_call.1
$region0: #{tpu_custom_call.1}
  #allocation0 [shape = 'u32[]', space=smem, size = 0x4, offset = 0x4, fixed_abs, tag = 'smem constant byte address 0x4 - core index']
  #allocation1 [shape = 'u32[72,128]{1,0:T(1,128)}', space=vmem, size = 0x9000, scoped, tag = 'internal scratch']
  %s0 = inlined_call_operand.hbm [shape: f32[1,128], index: 0, kind: input, shape index: {}]
  %s1 = inlined_call_operand.hbm [shape: s32[528,128], index: 1, kind: input, shape index: {}]
  %s2 = inlined_call_operand.hbm [shape: f32[528,128], index: 2, kind: output, shape index: {}]
  %s3 = sld [smem:[#allocation0]]
  $region26: #{tpu_custom_call.1} parent=0
    _
  %s5 = ssub.s32 1, %s3
  %s6 = scalar_select 0, %s5, %s3
  $region1: #{tpu_custom_call.1} parent=0
    #allocation2 [shape = 'u8[512]{0}', space=vmem, size = 0x400, scoped, tag = 'input window, operand 0, single buffered']
    #allocation3 [shape = 's32[1]{0}', space=sflag, size = 0x4, scoped, tag = 'scoped memory for tpu_custom_call.1']
    #allocation4 [shape = 's32[1]{0}', space=sflag, size = 0x4, scoped, tag = 'scoped memory for tpu_custom_call.1']
    #allocation5 [shape = 'u8[270336]{0}', space=vmem, size = 0x42000, scoped, tag = 'input window, operand 1, single buffered']
    #allocation6 [shape = 's32[1]{0}', space=sflag, size = 0x4, scoped, tag = 'scoped memory for tpu_custom_call.1']
    #allocation7 [shape = 'u8[270336]{0}', space=vmem, size = 0x42000, scoped, tag = 'output window, operand 0, single buffered']
    %7 = vsyncpa [#allocation3], 0
    %8 = vsyncpa [#allocation6], 0
    %9 = vsyncpa [#allocation4], 0
    // Predicated region
    $region2: #{tpu_custom_call.1} parent=1 // pred_check
      _
    $region3: #{tpu_custom_call.1} parent=1 // pred_check_branch
      %11 = sbr.rel (0) target = $region5
    $region4: #{tpu_custom_call.1} parent=1 // pred_region
      %13 = vsyncadd [#allocation3], 0
      %s15 = sshll.u32 %s0, 4
      %s16 = int_to_ptr.hbm [resolvable:$true] %s15
      %s17 = sshll.u32 [#allocation2], 4
      %s18 = int_to_ptr.vmem [resolvable:$true] %s17
      %20 = dma.hbm_to_vmem [thread:$0]  %s16, 16, %s18, [#allocation3]
    $region5: #{tpu_custom_call.1} parent=1 // pred_fallthru
      _
    // Predicated region
    $region6: #{tpu_custom_call.1} parent=1 // pred_check
      _
    $region7: #{tpu_custom_call.1} parent=1 // pred_check_branch
      %22 = sbr.rel (0) target = $region9
    $region8: #{tpu_custom_call.1} parent=1 // pred_region
      %24 = vsyncadd [#allocation6], 0
      %s25 = sshll.u32 %s1, 4
      %s26 = int_to_ptr.hbm [resolvable:$true] %s25
      %s27 = sshll.u32 [#allocation5], 4
      %s28 = int_to_ptr.vmem [resolvable:$true] %s27
      %33 = dma.hbm_to_vmem [thread:$0]  %s26, 8448, %s28, [#allocation6], 128, 128, 8
    $region9: #{tpu_custom_call.1} parent=1 // pred_fallthru
      _
    // Predicated region
    $region10: #{tpu_custom_call.1} parent=1 // pred_check
      _
    $region11: #{tpu_custom_call.1} parent=1 // pred_check_branch
      %35 = sbr.rel (0) target = $region13
    $region12: #{tpu_custom_call.1} parent=1 // pred_region
      %37 = dma.done [#allocation3], 16
    $region13: #{tpu_custom_call.1} parent=1 // pred_fallthru
      _
    // Predicated region
    $region14: #{tpu_custom_call.1} parent=1 // pred_check
      _
    $region15: #{tpu_custom_call.1} parent=1 // pred_check_branch
      %39 = sbr.rel (0) target = $region17
    $region16: #{tpu_custom_call.1} parent=1 // pred_region
      %41 = dma.done [#allocation6], 8448
    $region17: #{tpu_custom_call.1} parent=1 // pred_fallthru
      _
    %v42 = vld [vmem:[#allocation5] sm:$0xff]
    %v43 = vld [vmem:[#allocation5 + $0x8] sm:$0xff]
    %v44 = vld [vmem:[#allocation5 + $0x10] sm:$0xff]
    %v45 = vld [vmem:[#allocation5 + $0x18] sm:$0xff]
    %v46 = vld [vmem:[#allocation5 + $0x20] sm:$0xff]
    %v47 = vld [vmem:[#allocation5 + $0x28] sm:$0xff]
    %v48 = vld [vmem:[#allocation5 + $0x30] sm:$0xff]
    %v49 = vld [vmem:[#allocation5 + $0x38] sm:$0xff]
    %v50 = vld [vmem:[#allocation5 + $0x40] sm:$0xff]
    %v51 = vld [vmem:[#allocation5 + $0x48] sm:$0xff]
    %v52 = vld [vmem:[#allocation5 + $0x50] sm:$0xff]
    %v53 = vld [vmem:[#allocation5 + $0x58] sm:$0xff]
    %v54 = vld [vmem:[#allocation5 + $0x60] sm:$0xff]
    %v55 = vld [vmem:[#allocation5 + $0x68] sm:$0xff]
    %v56 = vld [vmem:[#allocation5 + $0x70] sm:$0xff]
    %v57 = vld [vmem:[#allocation5 + $0x78] sm:$0xff]
    %v58 = vld [vmem:[#allocation5 + $0x80] sm:$0xff]
    %v59 = vld [vmem:[#allocation5 + $0x88] sm:$0xff]
    %v60 = vld [vmem:[#allocation5 + $0x90] sm:$0xff]
    %v61 = vld [vmem:[#allocation5 + $0x98] sm:$0xff]
    %v62 = vld [vmem:[#allocation5 + $0xa0] sm:$0xff]
    %v63 = vld [vmem:[#allocation5 + $0xa8] sm:$0xff]
    %v64 = vld [vmem:[#allocation5 + $0xb0] sm:$0xff]
    %v65 = vld [vmem:[#allocation5 + $0xb8] sm:$0xff]
    %v66 = vld [vmem:[#allocation5 + $0xc0] sm:$0xff]
    %v67 = vld [vmem:[#allocation5 + $0xc8] sm:$0xff]
    %v68 = vld [vmem:[#allocation5 + $0xd0] sm:$0xff]
    %v69 = vld [vmem:[#allocation5 + $0xd8] sm:$0xff]
    %v70 = vld [vmem:[#allocation5 + $0xe0] sm:$0xff]
    %v71 = vld [vmem:[#allocation5 + $0xe8] sm:$0xff]
    %v72 = vld [vmem:[#allocation5 + $0xf0] sm:$0xff]
    %v73 = vld [vmem:[#allocation5 + $0xf8] sm:$0xff]
    %v74 = vld [vmem:[#allocation5 + $0x100] sm:$0xff]
    %v75 = vld [vmem:[#allocation5 + $0x108] sm:$0xff]
    %v76 = vld [vmem:[#allocation5 + $0x110] sm:$0xff]
    %v77 = vld [vmem:[#allocation5 + $0x118] sm:$0xff]
    %v78 = vld [vmem:[#allocation5 + $0x120] sm:$0xff]
    %v79 = vld [vmem:[#allocation5 + $0x128] sm:$0xff]
    %v80 = vld [vmem:[#allocation5 + $0x130] sm:$0xff]
    %v81 = vld [vmem:[#allocation5 + $0x138] sm:$0xff]
    %v82 = vld [vmem:[#allocation5 + $0x140] sm:$0xff]
    %v83 = vld [vmem:[#allocation5 + $0x148] sm:$0xff]
    %v84 = vld [vmem:[#allocation5 + $0x150] sm:$0xff]
    %v85 = vld [vmem:[#allocation5 + $0x158] sm:$0xff]
    %v86 = vld [vmem:[#allocation5 + $0x160] sm:$0xff]
    %v87 = vld [vmem:[#allocation5 + $0x168] sm:$0xff]
    %v88 = vld [vmem:[#allocation5 + $0x170] sm:$0xff]
    %v89 = vld [vmem:[#allocation5 + $0x178] sm:$0xff]
    %v90 = vld [vmem:[#allocation5 + $0x180] sm:$0xff]
    %v91 = vld [vmem:[#allocation5 + $0x188] sm:$0xff]
    %v92 = vld [vmem:[#allocation5 + $0x190] sm:$0xff]
    %v93 = vld [vmem:[#allocation5 + $0x198] sm:$0xff]
    %v94 = vld [vmem:[#allocation5 + $0x1a0] sm:$0xff]
    %v95 = vld [vmem:[#allocation5 + $0x1a8] sm:$0xff]
    %v96 = vld [vmem:[#allocation5 + $0x1b0] sm:$0xff]
    %v97 = vld [vmem:[#allocation5 + $0x1b8] sm:$0xff]
    %v98 = vld [vmem:[#allocation5 + $0x1c0] sm:$0xff]
    %v99 = vld [vmem:[#allocation5 + $0x1c8] sm:$0xff]
    %v100 = vld [vmem:[#allocation5 + $0x1d0] sm:$0xff]
    %v101 = vld [vmem:[#allocation5 + $0x1d8] sm:$0xff]
    %v102 = vld [vmem:[#allocation5 + $0x1e0] sm:$0xff]
    %v103 = vld [vmem:[#allocation5 + $0x1e8] sm:$0xff]
    %v104 = vld [vmem:[#allocation5 + $0x1f0] sm:$0xff]
    %v105 = vld [vmem:[#allocation5 + $0x1f8] sm:$0xff]
    %v106 = vld [vmem:[#allocation5 + $0x200] sm:$0xff]
    %v107 = vld [vmem:[#allocation5 + $0x208] sm:$0xff]
    %vm108 = vcmp.gt.s32.totalorder %v42, 0
    %v109 = vsel %vm108, %v42, 0
    %vm110 = vcmp.gt.s32.totalorder %v43, 0
    %v111 = vsel %vm110, %v43, 0
    %vm112 = vcmp.gt.s32.totalorder %v44, 0
    %v113 = vsel %vm112, %v44, 0
    %vm114 = vcmp.gt.s32.totalorder %v45, 0
    %v115 = vsel %vm114, %v45, 0
    %vm116 = vcmp.gt.s32.totalorder %v46, 0
    %v117 = vsel %vm116, %v46, 0
    %vm118 = vcmp.gt.s32.totalorder %v47, 0
    %v119 = vsel %vm118, %v47, 0
    %vm120 = vcmp.gt.s32.totalorder %v48, 0
    %v121 = vsel %vm120, %v48, 0
    %vm122 = vcmp.gt.s32.totalorder %v49, 0
    %v123 = vsel %vm122, %v49, 0
    %vm124 = vcmp.gt.s32.totalorder %v50, 0
    %v125 = vsel %vm124, %v50, 0
    %vm126 = vcmp.gt.s32.totalorder %v51, 0
    %v127 = vsel %vm126, %v51, 0
    %vm128 = vcmp.gt.s32.totalorder %v52, 0
    %v129 = vsel %vm128, %v52, 0
    %vm130 = vcmp.gt.s32.totalorder %v53, 0
    %v131 = vsel %vm130, %v53, 0
    %vm132 = vcmp.gt.s32.totalorder %v54, 0
    %v133 = vsel %vm132, %v54, 0
    %vm134 = vcmp.gt.s32.totalorder %v55, 0
    %v135 = vsel %vm134, %v55, 0
    %vm136 = vcmp.gt.s32.totalorder %v56, 0
    %v137 = vsel %vm136, %v56, 0
    %vm138 = vcmp.gt.s32.totalorder %v57, 0
    %v139 = vsel %vm138, %v57, 0
    %vm140 = vcmp.gt.s32.totalorder %v58, 0
    %v141 = vsel %vm140, %v58, 0
    %vm142 = vcmp.gt.s32.totalorder %v59, 0
    %v143 = vsel %vm142, %v59, 0
    %vm144 = vcmp.gt.s32.totalorder %v60, 0
    %v145 = vsel %vm144, %v60, 0
    %vm146 = vcmp.gt.s32.totalorder %v61, 0
    %v147 = vsel %vm146, %v61, 0
    %vm148 = vcmp.gt.s32.totalorder %v62, 0
    %v149 = vsel %vm148, %v62, 0
    %vm150 = vcmp.gt.s32.totalorder %v63, 0
    %v151 = vsel %vm150, %v63, 0
    %vm152 = vcmp.gt.s32.totalorder %v64, 0
    %v153 = vsel %vm152, %v64, 0
    %vm154 = vcmp.gt.s32.totalorder %v65, 0
    %v155 = vsel %vm154, %v65, 0
    %vm156 = vcmp.gt.s32.totalorder %v66, 0
    %v157 = vsel %vm156, %v66, 0
    %vm158 = vcmp.gt.s32.totalorder %v67, 0
    %v159 = vsel %vm158, %v67, 0
    %vm160 = vcmp.gt.s32.totalorder %v68, 0
    %v161 = vsel %vm160, %v68, 0
    %vm162 = vcmp.gt.s32.totalorder %v69, 0
    %v163 = vsel %vm162, %v69, 0
    %vm164 = vcmp.gt.s32.totalorder %v70, 0
    %v165 = vsel %vm164, %v70, 0
    %vm166 = vcmp.gt.s32.totalorder %v71, 0
    %v167 = vsel %vm166, %v71, 0
    %vm168 = vcmp.gt.s32.totalorder %v72, 0
    %v169 = vsel %vm168, %v72, 0
    %vm170 = vcmp.gt.s32.totalorder %v73, 0
    %v171 = vsel %vm170, %v73, 0
    %vm172 = vcmp.gt.s32.totalorder %v74, 0
    %v173 = vsel %vm172, %v74, 0
    %vm174 = vcmp.gt.s32.totalorder %v75, 0
    %v175 = vsel %vm174, %v75, 0
    %vm176 = vcmp.gt.s32.totalorder %v76, 0
    %v177 = vsel %vm176, %v76, 0
    %vm178 = vcmp.gt.s32.totalorder %v77, 0
    %v179 = vsel %vm178, %v77, 0
    %vm180 = vcmp.gt.s32.totalorder %v78, 0
    %v181 = vsel %vm180, %v78, 0
    %vm182 = vcmp.gt.s32.totalorder %v79, 0
    %v183 = vsel %vm182, %v79, 0
    %vm184 = vcmp.gt.s32.totalorder %v80, 0
    %v185 = vsel %vm184, %v80, 0
    %vm186 = vcmp.gt.s32.totalorder %v81, 0
    %v187 = vsel %vm186, %v81, 0
    %vm188 = vcmp.gt.s32.totalorder %v82, 0
    %v189 = vsel %vm188, %v82, 0
    %vm190 = vcmp.gt.s32.totalorder %v83, 0
    %v191 = vsel %vm190, %v83, 0
    %vm192 = vcmp.gt.s32.totalorder %v84, 0
    %v193 = vsel %vm192, %v84, 0
    %vm194 = vcmp.gt.s32.totalorder %v85, 0
    %v195 = vsel %vm194, %v85, 0
    %vm196 = vcmp.gt.s32.totalorder %v86, 0
    %v197 = vsel %vm196, %v86, 0
    %vm198 = vcmp.gt.s32.totalorder %v87, 0
    %v199 = vsel %vm198, %v87, 0
    %vm200 = vcmp.gt.s32.totalorder %v88, 0
    %v201 = vsel %vm200, %v88, 0
    %vm202 = vcmp.gt.s32.totalorder %v89, 0
    %v203 = vsel %vm202, %v89, 0
    %vm204 = vcmp.gt.s32.totalorder %v90, 0
    %v205 = vsel %vm204, %v90, 0
    %vm206 = vcmp.gt.s32.totalorder %v91, 0
    %v207 = vsel %vm206, %v91, 0
    %vm208 = vcmp.gt.s32.totalorder %v92, 0
    %v209 = vsel %vm208, %v92, 0
    %vm210 = vcmp.gt.s32.totalorder %v93, 0
    %v211 = vsel %vm210, %v93, 0
    %vm212 = vcmp.gt.s32.totalorder %v94, 0
    %v213 = vsel %vm212, %v94, 0
    %vm214 = vcmp.gt.s32.totalorder %v95, 0
    %v215 = vsel %vm214, %v95, 0
    %vm216 = vcmp.gt.s32.totalorder %v96, 0
    %v217 = vsel %vm216, %v96, 0
    %vm218 = vcmp.gt.s32.totalorder %v97, 0
    %v219 = vsel %vm218, %v97, 0
    %vm220 = vcmp.gt.s32.totalorder %v98, 0
    %v221 = vsel %vm220, %v98, 0
    %vm222 = vcmp.gt.s32.totalorder %v99, 0
    %v223 = vsel %vm222, %v99, 0
    %vm224 = vcmp.gt.s32.totalorder %v100, 0
    %v225 = vsel %vm224, %v100, 0
    %vm226 = vcmp.gt.s32.totalorder %v101, 0
    %v227 = vsel %vm226, %v101, 0
    %vm228 = vcmp.gt.s32.totalorder %v102, 0
    %v229 = vsel %vm228, %v102, 0
    %vm230 = vcmp.gt.s32.totalorder %v103, 0
    %v231 = vsel %vm230, %v103, 0
    %vm232 = vcmp.gt.s32.totalorder %v104, 0
    %v233 = vsel %vm232, %v104, 0
    %vm234 = vcmp.gt.s32.totalorder %v105, 0
    %v235 = vsel %vm234, %v105, 0
    %vm236 = vcmp.gt.s32.totalorder %v106, 0
    %v237 = vsel %vm236, %v106, 0
    %vm238 = vcmp.gt.s32.totalorder %v107, 0
    %v239 = vsel %vm238, %v107, 0
    %vm240 = vcmp.lt.s32.totalorder %v109, 20
    %v241 = vsel %vm240, %v109, 20
    %vm242 = vcmp.lt.s32.totalorder %v111, 20
    %v243 = vsel %vm242, %v111, 20
    %vm244 = vcmp.lt.s32.totalorder %v113, 20
    %v245 = vsel %vm244, %v113, 20
    %vm246 = vcmp.lt.s32.totalorder %v115, 20
    %v247 = vsel %vm246, %v115, 20
    %vm248 = vcmp.lt.s32.totalorder %v117, 20
    %v249 = vsel %vm248, %v117, 20
    %vm250 = vcmp.lt.s32.totalorder %v119, 20
    %v251 = vsel %vm250, %v119, 20
    %vm252 = vcmp.lt.s32.totalorder %v121, 20
    %v253 = vsel %vm252, %v121, 20
    %vm254 = vcmp.lt.s32.totalorder %v123, 20
    %v255 = vsel %vm254, %v123, 20
    %vm256 = vcmp.lt.s32.totalorder %v125, 20
    %v257 = vsel %vm256, %v125, 20
    %vm258 = vcmp.lt.s32.totalorder %v127, 20
    %v259 = vsel %vm258, %v127, 20
    %vm260 = vcmp.lt.s32.totalorder %v129, 20
    %v261 = vsel %vm260, %v129, 20
    %vm262 = vcmp.lt.s32.totalorder %v131, 20
    %v263 = vsel %vm262, %v131, 20
    %vm264 = vcmp.lt.s32.totalorder %v133, 20
    %v265 = vsel %vm264, %v133, 20
    %vm266 = vcmp.lt.s32.totalorder %v135, 20
    %v267 = vsel %vm266, %v135, 20
    %vm268 = vcmp.lt.s32.totalorder %v137, 20
    %v269 = vsel %vm268, %v137, 20
    %vm270 = vcmp.lt.s32.totalorder %v139, 20
    %v271 = vsel %vm270, %v139, 20
    %vm272 = vcmp.lt.s32.totalorder %v141, 20
    %v273 = vsel %vm272, %v141, 20
    %vm274 = vcmp.lt.s32.totalorder %v143, 20
    %v275 = vsel %vm274, %v143, 20
    %vm276 = vcmp.lt.s32.totalorder %v145, 20
    %v277 = vsel %vm276, %v145, 20
    %vm278 = vcmp.lt.s32.totalorder %v147, 20
    %v279 = vsel %vm278, %v147, 20
    %vm280 = vcmp.lt.s32.totalorder %v149, 20
    %v281 = vsel %vm280, %v149, 20
    %vm282 = vcmp.lt.s32.totalorder %v151, 20
    %v283 = vsel %vm282, %v151, 20
    %vm284 = vcmp.lt.s32.totalorder %v153, 20
    %v285 = vsel %vm284, %v153, 20
    %vm286 = vcmp.lt.s32.totalorder %v155, 20
    %v287 = vsel %vm286, %v155, 20
    %vm288 = vcmp.lt.s32.totalorder %v157, 20
    %v289 = vsel %vm288, %v157, 20
    %vm290 = vcmp.lt.s32.totalorder %v159, 20
    %v291 = vsel %vm290, %v159, 20
    %vm292 = vcmp.lt.s32.totalorder %v161, 20
    %v293 = vsel %vm292, %v161, 20
    %vm294 = vcmp.lt.s32.totalorder %v163, 20
    %v295 = vsel %vm294, %v163, 20
    %vm296 = vcmp.lt.s32.totalorder %v165, 20
    %v297 = vsel %vm296, %v165, 20
    %vm298 = vcmp.lt.s32.totalorder %v167, 20
    %v299 = vsel %vm298, %v167, 20
    %vm300 = vcmp.lt.s32.totalorder %v169, 20
    %v301 = vsel %vm300, %v169, 20
    %vm302 = vcmp.lt.s32.totalorder %v171, 20
    %v303 = vsel %vm302, %v171, 20
    %vm304 = vcmp.lt.s32.totalorder %v173, 20
    %v305 = vsel %vm304, %v173, 20
    %vm306 = vcmp.lt.s32.totalorder %v175, 20
    %v307 = vsel %vm306, %v175, 20
    %vm308 = vcmp.lt.s32.totalorder %v177, 20
    %v309 = vsel %vm308, %v177, 20
    %vm310 = vcmp.lt.s32.totalorder %v179, 20
    %v311 = vsel %vm310, %v179, 20
    %vm312 = vcmp.lt.s32.totalorder %v181, 20
    %v313 = vsel %vm312, %v181, 20
    %vm314 = vcmp.lt.s32.totalorder %v183, 20
    %v315 = vsel %vm314, %v183, 20
    %vm316 = vcmp.lt.s32.totalorder %v185, 20
    %v317 = vsel %vm316, %v185, 20
    %vm318 = vcmp.lt.s32.totalorder %v187, 20
    %v319 = vsel %vm318, %v187, 20
    %vm320 = vcmp.lt.s32.totalorder %v189, 20
    %v321 = vsel %vm320, %v189, 20
    %vm322 = vcmp.lt.s32.totalorder %v191, 20
    %v323 = vsel %vm322, %v191, 20
    %vm324 = vcmp.lt.s32.totalorder %v193, 20
    %v325 = vsel %vm324, %v193, 20
    %vm326 = vcmp.lt.s32.totalorder %v195, 20
    %v327 = vsel %vm326, %v195, 20
    %vm328 = vcmp.lt.s32.totalorder %v197, 20
    %v329 = vsel %vm328, %v197, 20
    %vm330 = vcmp.lt.s32.totalorder %v199, 20
    %v331 = vsel %vm330, %v199, 20
    %vm332 = vcmp.lt.s32.totalorder %v201, 20
    %v333 = vsel %vm332, %v201, 20
    %vm334 = vcmp.lt.s32.totalorder %v203, 20
    %v335 = vsel %vm334, %v203, 20
    %vm336 = vcmp.lt.s32.totalorder %v205, 20
    %v337 = vsel %vm336, %v205, 20
    %vm338 = vcmp.lt.s32.totalorder %v207, 20
    %v339 = vsel %vm338, %v207, 20
    %vm340 = vcmp.lt.s32.totalorder %v209, 20
    %v341 = vsel %vm340, %v209, 20
    %vm342 = vcmp.lt.s32.totalorder %v211, 20
    %v343 = vsel %vm342, %v211, 20
    %vm344 = vcmp.lt.s32.totalorder %v213, 20
    %v345 = vsel %vm344, %v213, 20
    %vm346 = vcmp.lt.s32.totalorder %v215, 20
    %v347 = vsel %vm346, %v215, 20
    %vm348 = vcmp.lt.s32.totalorder %v217, 20
    %v349 = vsel %vm348, %v217, 20
    %vm350 = vcmp.lt.s32.totalorder %v219, 20
    %v351 = vsel %vm350, %v219, 20
    %vm352 = vcmp.lt.s32.totalorder %v221, 20
    %v353 = vsel %vm352, %v221, 20
    %vm354 = vcmp.lt.s32.totalorder %v223, 20
    %v355 = vsel %vm354, %v223, 20
    %vm356 = vcmp.lt.s32.totalorder %v225, 20
    %v357 = vsel %vm356, %v225, 20
    %vm358 = vcmp.lt.s32.totalorder %v227, 20
    %v359 = vsel %vm358, %v227, 20
    %vm360 = vcmp.lt.s32.totalorder %v229, 20
    %v361 = vsel %vm360, %v229, 20
    %vm362 = vcmp.lt.s32.totalorder %v231, 20
    %v363 = vsel %vm362, %v231, 20
    %vm364 = vcmp.lt.s32.totalorder %v233, 20
    %v365 = vsel %vm364, %v233, 20
    %vm366 = vcmp.lt.s32.totalorder %v235, 20
    %v367 = vsel %vm366, %v235, 20
    %vm368 = vcmp.lt.s32.totalorder %v237, 20
    %v369 = vsel %vm368, %v237, 20
    %vm370 = vcmp.lt.s32.totalorder %v239, 20
    %v371 = vsel %vm370, %v239, 20
    %v372 = vld [vmem:[#allocation2] sm:$0x1]
    %v374 = vperm.slane %v372, 0
    %376 = vset.pattern.permute.xlu0 %v241
    %377 = vperm.xlu0 %376, %v374
    %v378 = vpop.permute.xlu0 %377
    %379 = vset.pattern.permute.xlu0 %v243
    %380 = vperm.xlu0 %379, %v374
    %v381 = vpop.permute.xlu0 %380
    %382 = vset.pattern.permute.xlu0 %v245
    %383 = vperm.xlu0 %382, %v374
    %v384 = vpop.permute.xlu0 %383
    %385 = vset.pattern.permute.xlu0 %v247
    %386 = vperm.xlu0 %385, %v374
    %v387 = vpop.permute.xlu0 %386
    %388 = vset.pattern.permute.xlu0 %v249
    %389 = vperm.xlu0 %388, %v374
    %v390 = vpop.permute.xlu0 %389
    %391 = vset.pattern.permute.xlu0 %v251
    %392 = vperm.xlu0 %391, %v374
    %v393 = vpop.permute.xlu0 %392
    %394 = vset.pattern.permute.xlu0 %v253
    %395 = vperm.xlu0 %394, %v374
    %v396 = vpop.permute.xlu0 %395
    %397 = vset.pattern.permute.xlu0 %v255
    %398 = vperm.xlu0 %397, %v374
    %v399 = vpop.permute.xlu0 %398
    %400 = vset.pattern.permute.xlu0 %v257
    %401 = vperm.xlu0 %400, %v374
    %v402 = vpop.permute.xlu0 %401
    %403 = vset.pattern.permute.xlu0 %v259
    %404 = vperm.xlu0 %403, %v374
    %v405 = vpop.permute.xlu0 %404
    %406 = vset.pattern.permute.xlu0 %v261
    %407 = vperm.xlu0 %406, %v374
    %v408 = vpop.permute.xlu0 %407
    %409 = vset.pattern.permute.xlu0 %v263
    %410 = vperm.xlu0 %409, %v374
    %v411 = vpop.permute.xlu0 %410
    %412 = vset.pattern.permute.xlu0 %v265
    %413 = vperm.xlu0 %412, %v374
    %v414 = vpop.permute.xlu0 %413
    %415 = vset.pattern.permute.xlu0 %v267
    %416 = vperm.xlu0 %415, %v374
    %v417 = vpop.permute.xlu0 %416
    %418 = vset.pattern.permute.xlu0 %v269
    %419 = vperm.xlu0 %418, %v374
    %v420 = vpop.permute.xlu0 %419
    %421 = vset.pattern.permute.xlu0 %v271
    %422 = vperm.xlu0 %421, %v374
    %v423 = vpop.permute.xlu0 %422
    %424 = vset.pattern.permute.xlu0 %v273
    %425 = vperm.xlu0 %424, %v374
    %v426 = vpop.permute.xlu0 %425
    %427 = vset.pattern.permute.xlu0 %v275
    %428 = vperm.xlu0 %427, %v374
    %v429 = vpop.permute.xlu0 %428
    %430 = vset.pattern.permute.xlu0 %v277
    %431 = vperm.xlu0 %430, %v374
    %v432 = vpop.permute.xlu0 %431
    %433 = vset.pattern.permute.xlu0 %v279
    %434 = vperm.xlu0 %433, %v374
    %v435 = vpop.permute.xlu0 %434
    %436 = vset.pattern.permute.xlu0 %v281
    %437 = vperm.xlu0 %436, %v374
    %v438 = vpop.permute.xlu0 %437
    %439 = vset.pattern.permute.xlu0 %v283
    %440 = vperm.xlu0 %439, %v374
    %v441 = vpop.permute.xlu0 %440
    %442 = vset.pattern.permute.xlu0 %v285
    %443 = vperm.xlu0 %442, %v374
    %v444 = vpop.permute.xlu0 %443
    %445 = vset.pattern.permute.xlu0 %v287
    %446 = vperm.xlu0 %445, %v374
    %v447 = vpop.permute.xlu0 %446
    %448 = vset.pattern.permute.xlu0 %v289
    %449 = vperm.xlu0 %448, %v374
    %v450 = vpop.permute.xlu0 %449
    %451 = vset.pattern.permute.xlu0 %v291
    %452 = vperm.xlu0 %451, %v374
    %v453 = vpop.permute.xlu0 %452
    %454 = vset.pattern.permute.xlu0 %v293
    %455 = vperm.xlu0 %454, %v374
    %v456 = vpop.permute.xlu0 %455
    %457 = vset.pattern.permute.xlu0 %v295
    %458 = vperm.xlu0 %457, %v374
    %v459 = vpop.permute.xlu0 %458
    %460 = vset.pattern.permute.xlu0 %v297
    %461 = vperm.xlu0 %460, %v374
    %v462 = vpop.permute.xlu0 %461
    %463 = vset.pattern.permute.xlu0 %v299
    %464 = vperm.xlu0 %463, %v374
    %v465 = vpop.permute.xlu0 %464
    %466 = vset.pattern.permute.xlu0 %v301
    %467 = vperm.xlu0 %466, %v374
    %v468 = vpop.permute.xlu0 %467
    %469 = vset.pattern.permute.xlu0 %v303
    %470 = vperm.xlu0 %469, %v374
    %v471 = vpop.permute.xlu0 %470
    %472 = vset.pattern.permute.xlu0 %v305
    %473 = vperm.xlu0 %472, %v374
    %v474 = vpop.permute.xlu0 %473
    %475 = vset.pattern.permute.xlu0 %v307
    %476 = vperm.xlu0 %475, %v374
    %v477 = vpop.permute.xlu0 %476
    %478 = vset.pattern.permute.xlu0 %v309
    %479 = vperm.xlu0 %478, %v374
    %v480 = vpop.permute.xlu0 %479
    %481 = vset.pattern.permute.xlu0 %v311
    %482 = vperm.xlu0 %481, %v374
    %v483 = vpop.permute.xlu0 %482
    %484 = vset.pattern.permute.xlu0 %v313
    %485 = vperm.xlu0 %484, %v374
    %v486 = vpop.permute.xlu0 %485
    %487 = vset.pattern.permute.xlu0 %v315
    %488 = vperm.xlu0 %487, %v374
    %v489 = vpop.permute.xlu0 %488
    %490 = vset.pattern.permute.xlu0 %v317
    %491 = vperm.xlu0 %490, %v374
    %v492 = vpop.permute.xlu0 %491
    %493 = vset.pattern.permute.xlu0 %v319
    %494 = vperm.xlu0 %493, %v374
    %v495 = vpop.permute.xlu0 %494
    %496 = vset.pattern.permute.xlu0 %v321
    %497 = vperm.xlu0 %496, %v374
    %v498 = vpop.permute.xlu0 %497
    %499 = vset.pattern.permute.xlu0 %v323
    %500 = vperm.xlu0 %499, %v374
    %v501 = vpop.permute.xlu0 %500
    %502 = vset.pattern.permute.xlu0 %v325
    %503 = vperm.xlu0 %502, %v374
    %v504 = vpop.permute.xlu0 %503
    %505 = vset.pattern.permute.xlu0 %v327
    %506 = vperm.xlu0 %505, %v374
    %v507 = vpop.permute.xlu0 %506
    %508 = vset.pattern.permute.xlu0 %v329
    %509 = vperm.xlu0 %508, %v374
    %v510 = vpop.permute.xlu0 %509
    %511 = vset.pattern.permute.xlu0 %v331
    %512 = vperm.xlu0 %511, %v374
    %v513 = vpop.permute.xlu0 %512
    %514 = vset.pattern.permute.xlu0 %v333
    %515 = vperm.xlu0 %514, %v374
    %v516 = vpop.permute.xlu0 %515
    %517 = vset.pattern.permute.xlu0 %v335
    %518 = vperm.xlu0 %517, %v374
    %v519 = vpop.permute.xlu0 %518
    %520 = vset.pattern.permute.xlu0 %v337
    %521 = vperm.xlu0 %520, %v374
    %v522 = vpop.permute.xlu0 %521
    %523 = vset.pattern.permute.xlu0 %v339
    %524 = vperm.xlu0 %523, %v374
    %v525 = vpop.permute.xlu0 %524
    %526 = vset.pattern.permute.xlu0 %v341
    %527 = vperm.xlu0 %526, %v374
    %v528 = vpop.permute.xlu0 %527
    %529 = vset.pattern.permute.xlu0 %v343
    %530 = vperm.xlu0 %529, %v374
    %v531 = vpop.permute.xlu0 %530
    %532 = vset.pattern.permute.xlu0 %v345
    %533 = vperm.xlu0 %532, %v374
    %v534 = vpop.permute.xlu0 %533
    %535 = vset.pattern.permute.xlu0 %v347
    %536 = vperm.xlu0 %535, %v374
    %v537 = vpop.permute.xlu0 %536
    %538 = vset.pattern.permute.xlu0 %v349
    %539 = vperm.xlu0 %538, %v374
    %v540 = vpop.permute.xlu0 %539
    %541 = vset.pattern.permute.xlu0 %v351
    %542 = vperm.xlu0 %541, %v374
    %v543 = vpop.permute.xlu0 %542
    %544 = vset.pattern.permute.xlu0 %v353
    %545 = vperm.xlu0 %544, %v374
    %v546 = vpop.permute.xlu0 %545
    %547 = vset.pattern.permute.xlu0 %v355
    %548 = vperm.xlu0 %547, %v374
    %v549 = vpop.permute.xlu0 %548
    %550 = vset.pattern.permute.xlu0 %v357
    %551 = vperm.xlu0 %550, %v374
    %v552 = vpop.permute.xlu0 %551
    %553 = vset.pattern.permute.xlu0 %v359
    %554 = vperm.xlu0 %553, %v374
    %v555 = vpop.permute.xlu0 %554
    %556 = vset.pattern.permute.xlu0 %v361
    %557 = vperm.xlu0 %556, %v374
    %v558 = vpop.permute.xlu0 %557
    %559 = vset.pattern.permute.xlu0 %v363
    %560 = vperm.xlu0 %559, %v374
    %v561 = vpop.permute.xlu0 %560
    %562 = vset.pattern.permute.xlu0 %v365
    %563 = vperm.xlu0 %562, %v374
    %v564 = vpop.permute.xlu0 %563
    %565 = vset.pattern.permute.xlu0 %v367
    %566 = vperm.xlu0 %565, %v374
    %v567 = vpop.permute.xlu0 %566
    %568 = vset.pattern.permute.xlu0 %v369
    %569 = vperm.xlu0 %568, %v374
    %v570 = vpop.permute.xlu0 %569
    %571 = vset.pattern.permute.xlu0 %v371
    %572 = vperm.xlu0 %571, %v374
    %v573 = vpop.permute.xlu0 %572
    %574 = vst [vmem:[#allocation7] sm:$0xff] %v378
    %575 = vst [vmem:[#allocation7 + $0x8] sm:$0xff] %v381
    %576 = vst [vmem:[#allocation7 + $0x10] sm:$0xff] %v384
    %577 = vst [vmem:[#allocation7 + $0x18] sm:$0xff] %v387
    %578 = vst [vmem:[#allocation7 + $0x20] sm:$0xff] %v390
    %579 = vst [vmem:[#allocation7 + $0x28] sm:$0xff] %v393
    %580 = vst [vmem:[#allocation7 + $0x30] sm:$0xff] %v396
    %581 = vst [vmem:[#allocation7 + $0x38] sm:$0xff] %v399
    %582 = vst [vmem:[#allocation7 + $0x40] sm:$0xff] %v402
    %583 = vst [vmem:[#allocation7 + $0x48] sm:$0xff] %v405
    %584 = vst [vmem:[#allocation7 + $0x50] sm:$0xff] %v408
    %585 = vst [vmem:[#allocation7 + $0x58] sm:$0xff] %v411
    %586 = vst [vmem:[#allocation7 + $0x60] sm:$0xff] %v414
    %587 = vst [vmem:[#allocation7 + $0x68] sm:$0xff] %v417
    %588 = vst [vmem:[#allocation7 + $0x70] sm:$0xff] %v420
    %589 = vst [vmem:[#allocation7 + $0x78] sm:$0xff] %v423
    %590 = vst [vmem:[#allocation7 + $0x80] sm:$0xff] %v426
    %591 = vst [vmem:[#allocation7 + $0x88] sm:$0xff] %v429
    %592 = vst [vmem:[#allocation7 + $0x90] sm:$0xff] %v432
    %593 = vst [vmem:[#allocation7 + $0x98] sm:$0xff] %v435
    %594 = vst [vmem:[#allocation7 + $0xa0] sm:$0xff] %v438
    %595 = vst [vmem:[#allocation7 + $0xa8] sm:$0xff] %v441
    %596 = vst [vmem:[#allocation7 + $0xb0] sm:$0xff] %v444
    %597 = vst [vmem:[#allocation7 + $0xb8] sm:$0xff] %v447
    %598 = vst [vmem:[#allocation7 + $0xc0] sm:$0xff] %v450
    %599 = vst [vmem:[#allocation7 + $0xc8] sm:$0xff] %v453
    %600 = vst [vmem:[#allocation7 + $0xd0] sm:$0xff] %v456
    %601 = vst [vmem:[#allocation7 + $0xd8] sm:$0xff] %v459
    %602 = vst [vmem:[#allocation7 + $0xe0] sm:$0xff] %v462
    %603 = vst [vmem:[#allocation7 + $0xe8] sm:$0xff] %v465
    %604 = vst [vmem:[#allocation7 + $0xf0] sm:$0xff] %v468
    %605 = vst [vmem:[#allocation7 + $0xf8] sm:$0xff] %v471
    %606 = vst [vmem:[#allocation7 + $0x100] sm:$0xff] %v474
    %607 = vst [vmem:[#allocation7 + $0x108] sm:$0xff] %v477
    %608 = vst [vmem:[#allocation7 + $0x110] sm:$0xff] %v480
    %609 = vst [vmem:[#allocation7 + $0x118] sm:$0xff] %v483
    %610 = vst [vmem:[#allocation7 + $0x120] sm:$0xff] %v486
    %611 = vst [vmem:[#allocation7 + $0x128] sm:$0xff] %v489
    %612 = vst [vmem:[#allocation7 + $0x130] sm:$0xff] %v492
    %613 = vst [vmem:[#allocation7 + $0x138] sm:$0xff] %v495
    %614 = vst [vmem:[#allocation7 + $0x140] sm:$0xff] %v498
    %615 = vst [vmem:[#allocation7 + $0x148] sm:$0xff] %v501
    %616 = vst [vmem:[#allocation7 + $0x150] sm:$0xff] %v504
    %617 = vst [vmem:[#allocation7 + $0x158] sm:$0xff] %v507
    %618 = vst [vmem:[#allocation7 + $0x160] sm:$0xff] %v510
    %619 = vst [vmem:[#allocation7 + $0x168] sm:$0xff] %v513
    %620 = vst [vmem:[#allocation7 + $0x170] sm:$0xff] %v516
    %621 = vst [vmem:[#allocation7 + $0x178] sm:$0xff] %v519
    %622 = vst [vmem:[#allocation7 + $0x180] sm:$0xff] %v522
    %623 = vst [vmem:[#allocation7 + $0x188] sm:$0xff] %v525
    %624 = vst [vmem:[#allocation7 + $0x190] sm:$0xff] %v528
    %625 = vst [vmem:[#allocation7 + $0x198] sm:$0xff] %v531
    %626 = vst [vmem:[#allocation7 + $0x1a0] sm:$0xff] %v534
    %627 = vst [vmem:[#allocation7 + $0x1a8] sm:$0xff] %v537
    %628 = vst [vmem:[#allocation7 + $0x1b0] sm:$0xff] %v540
    %629 = vst [vmem:[#allocation7 + $0x1b8] sm:$0xff] %v543
    %630 = vst [vmem:[#allocation7 + $0x1c0] sm:$0xff] %v546
    %631 = vst [vmem:[#allocation7 + $0x1c8] sm:$0xff] %v549
    %632 = vst [vmem:[#allocation7 + $0x1d0] sm:$0xff] %v552
    %633 = vst [vmem:[#allocation7 + $0x1d8] sm:$0xff] %v555
    %634 = vst [vmem:[#allocation7 + $0x1e0] sm:$0xff] %v558
    %635 = vst [vmem:[#allocation7 + $0x1e8] sm:$0xff] %v561
    %636 = vst [vmem:[#allocation7 + $0x1f0] sm:$0xff] %v564
    %637 = vst [vmem:[#allocation7 + $0x1f8] sm:$0xff] %v567
    %638 = vst [vmem:[#allocation7 + $0x200] sm:$0xff] %v570
    %639 = vst [vmem:[#allocation7 + $0x208] sm:$0xff] %v573
    // Predicated region
    $region18: #{tpu_custom_call.1} parent=1 // pred_check
      _
    $region19: #{tpu_custom_call.1} parent=1 // pred_check_branch
      %641 = sbr.rel (0) target = $region21
    $region20: #{tpu_custom_call.1} parent=1 // pred_region
      %643 = vsyncadd [#allocation4], 0
      %s644 = sshll.u32 [#allocation7], 4
      %s645 = int_to_ptr.vmem [resolvable:$true] %s644
      %s646 = sshll.u32 %s2, 4
      %s647 = int_to_ptr.hbm [resolvable:$true] %s646
      %652 = dma.vmem_to_hbm [thread:$0]  %s645, 8448, %s647, [#allocation4], 128, 128, 8
    $region21: #{tpu_custom_call.1} parent=1 // pred_fallthru
      _
    // Predicated region
    $region22: #{tpu_custom_call.1} parent=1 // pred_check
      _
    $region23: #{tpu_custom_call.1} parent=1 // pred_check_branch
      %654 = sbr.rel (0) target = $region25
    $region24: #{tpu_custom_call.1} parent=1 // pred_region
      %656 = dma.done [#allocation4], 8448
    $region25: #{tpu_custom_call.1} parent=1 // pred_fallthru
      _
    %657 = vsyncpa [#allocation3], 1
    %658 = vsyncpa [#allocation6], 1
    %659 = vsyncpa [#allocation4], 1

</llo_original>
